<compile_context>
chip_gen: v6e
topology: v6e:2x2x1
jax: 0.10.0
libtpu: 0.0.40
codegen_flags: <defaults>
</compile_context>

<pallas_src>
import functools

import jax
import jax.numpy as jnp
from jax import lax
from jax.experimental import pallas as pl
from jax.experimental.pallas import tpu as pltpu

_NEG_BIG = -1e30          # finite "-inf": avoids NaN from (-inf) - (-inf)
_MIB = 1024 * 1024


def _round_up(x, m):
    return (x + m - 1) // m * m


def _pick_divisor(n, candidates):
    for c in candidates:
        if n % c == 0:
            return c
    return n


def _pick_t_tile(T, B):
    """Token tile on the lane axis: multiple of 128 (or full T)."""
    if T % 128 != 0:
        return T                                  # full-dim lane tile is legal
    cands = [c for c in (1024, 512, 256, 128) if T % c == 0]
    t = cands[0]                                  # largest -> >=1 KiB DMA rows
    if B == 1:
        # v7x has 2 TensorCores: keep >=2 "parallel" programs when batch == 1.
        for c in cands:
            if T // c >= 2:
                return c
    return t


def _ce_kernel(*refs, v_chunk, v_total, t_chunk, penalty_weight):
    """Grid = (batch, token_tile, vocab_tile); vocab is the reduction axis."""
    if penalty_weight != 0.0:
        (logits_ref, labels_ref, ids_ref, out_ref,
         m_ref, l_ref, lab_ref, arg_ref) = refs
    else:
        logits_ref, labels_ref, out_ref, m_ref, l_ref, lab_ref = refs
        ids_ref = arg_ref = None

    v_idx = pl.program_id(2)
    v_blk = logits_ref.shape[1]
    t_tile = logits_ref.shape[2]
    n_chunks = v_blk // v_chunk

    @pl.when(v_idx == 0)
    def _():
        m_ref[...] = jnp.full_like(m_ref, _NEG_BIG)
        l_ref[...] = jnp.zeros_like(l_ref)
        lab_ref[...] = jnp.zeros_like(lab_ref)
        if penalty_weight != 0.0:
            arg_ref[...] = jnp.zeros_like(arg_ref)

    labels = labels_ref[0]                                   # (1, t_tile) int32

    def chunk_body(c, carry):
        m_prev, l_prev, lab_prev, arg_prev = carry
        start = pl.multiple_of(c * v_chunk, v_chunk)
        chunk = logits_ref[0, pl.ds(start, v_chunk), :].astype(jnp.float32)
        base = v_idx * v_blk + c * v_chunk
        v_ids = lax.broadcasted_iota(jnp.int32, (v_chunk, 1), 0) + base
        valid = v_ids < v_total                 # masks the overhanging vocab tail
        chunk_m = jnp.where(valid, chunk, _NEG_BIG)

        # Label-logit gather: labels are < V, so padded rows / ignore_index
        # (-100) never hit and contribute exactly 0.
        hit = v_ids == labels
        lab_new = lab_prev + jnp.sum(jnp.where(hit, chunk, 0.0),
                                     axis=0, keepdims=True)

        # Online logsumexp over the vocab (sublane) axis.
        # NOTE: on v7x (and bf16 ingestion on v6e) these two sublane
        # reduce-adds could move to the idle MXU as a ones-row matmul with
        # precision=HIGHEST; left on the VPU since the f32 form is HBM-bound.
        cmax = jnp.max(chunk_m, axis=0, keepdims=True)       # (1, t_tile)
        m_new = jnp.maximum(m_prev, cmax)
        l_new = (l_prev * jnp.exp(m_prev - m_new)
                 + jnp.sum(jnp.exp(chunk_m - m_new), axis=0, keepdims=True))

        if penalty_weight != 0.0:
            # Running argmax (first occurrence) for the duplicate penalty.
            is_max = (chunk_m == cmax) & valid
            cand = jnp.min(jnp.where(is_max, v_ids, v_total),
                           axis=0, keepdims=True)
            arg_new = jnp.where(cmax > m_prev, cand, arg_prev)
        else:
            arg_new = arg_prev
        return m_new, l_new, lab_new, arg_new

    arg0 = (arg_ref[...] if penalty_weight != 0.0
            else jnp.zeros((1, t_tile), jnp.int32))
    init = (m_ref[...], l_ref[...], lab_ref[...], arg0)
    m_new, l_new, lab_new, arg_new = lax.fori_loop(
        0, n_chunks, chunk_body, init, unroll=min(n_chunks, 4))
    m_ref[...] = m_new
    l_ref[...] = l_new
    lab_ref[...] = lab_new
    if penalty_weight != 0.0:
        arg_ref[...] = arg_new

    # ---- finalize: per-token loss for this (batch, token-tile) -------------
    @pl.when(v_idx == pl.num_programs(2) - 1)
    def _():
        lse = m_ref[...] + jnp.log(l_ref[...])               # (1, t_tile)
        ce = jnp.where(labels == -100, 0.0, lse - lab_ref[...])
        if penalty_weight != 0.0:
            arg = arg_ref[...]                               # (1, t_tile) int32
            t_total = ids_ref.shape[1]
            n_t_chunks = t_total // t_chunk

            def dup_body(s, acc):
                st = pl.multiple_of(s * t_chunk, t_chunk)
                ids_c = ids_ref[0, pl.ds(st, t_chunk), :]    # (t_chunk, 1)
                eq = ids_c == arg                            # (t_chunk, t_tile)
                return jnp.maximum(
                    acc, jnp.max(eq.astype(jnp.int32), axis=0, keepdims=True))

            dup = lax.fori_loop(0, n_t_chunks, dup_body,
                                jnp.zeros((1, t_tile), jnp.int32))
            ce = ce * (1.0 + dup.astype(jnp.float32) * penalty_weight)
        out_ref[0] = ce


def cross_entropy_loss(logits_bvt, labels_bt, input_ids_bt, penalty_weight=0.0):
    """Forward of CrossEntropyLoss: logits (B, V, T); labels/input_ids (B, T)."""
    B, V, T = logits_bvt.shape
    itemsize = logits_bvt.dtype.itemsize
    penalty_weight = float(penalty_weight)

    labels = labels_bt.astype(jnp.int32).reshape(B, 1, T)    # tokens on lanes

    # ---- generation-aware block sizing & VMEM budget -----------------------
    try:
        vmem_cap = int(pltpu.get_tpu_info().vmem_capacity_bytes)
    except Exception:  # pragma: no cover - conservative (v7x-sized) fallback
        vmem_cap = 64 * _MIB
    target_blk = 4 * _MIB if vmem_cap <= 64 * _MIB else 8 * _MIB

    t_tile = _pick_t_tile(T, B)
    t_lanes = _round_up(t_tile, 128)                         # VMEM lane padding
    v_chunk = min(512, _round_up(V, 8))                      # in-kernel sub-chunk
    rows = max(v_chunk, target_blk // (t_lanes * itemsize))
    v_blk = _round_up(min(rows, _round_up(V, 8)), v_chunk)

    def vmem_estimate(vb):
        blk = _round_up(vb, 8) * t_lanes * itemsize          # logits block
        f32_tmp = v_chunk * t_lanes * 4                      # per-chunk temps
        ids_blk = (_round_up(T, 8) * 128 * 4) if penalty_weight != 0.0 else 0
        return 2 * blk + 8 * f32_tmp + 2 * ids_blk + 4 * _MIB

    vmem_budget = vmem_cap - 8 * _MIB
    while v_blk > v_chunk and vmem_estimate(v_blk) > vmem_budget:
        v_blk -= v_chunk
    vmem_limit = int(min(vmem_budget, max(32 * _MIB, vmem_estimate(v_blk))))

    n_v = pl.cdiv(V, v_blk)        # overhanging vocab tail is masked in-kernel
    n_t = T // t_tile
    grid = (B, n_t, n_v)
    t_chunk = _pick_divisor(T, (512, 256, 128, 64, 32, 16, 8))

    kernel = functools.partial(
        _ce_kernel, v_chunk=v_chunk, v_total=V, t_chunk=t_chunk,
        penalty_weight=penalty_weight)

    in_specs = [
        # logits stay (B, V, T): vocab -> sublanes, tokens -> lanes.
        pl.BlockSpec((1, v_blk, t_tile), lambda b, t, v: (b, v, t)),
        pl.BlockSpec((1, 1, t_tile), lambda b, t, v: (b, 0, t)),
    ]
    inputs = [logits_bvt, labels]
    scratch = [
        pltpu.VMEM((1, t_tile), jnp.float32),    # running max
        pltpu.VMEM((1, t_tile), jnp.float32),    # running sum-exp
        pltpu.VMEM((1, t_tile), jnp.float32),    # gathered label logit
    ]
    if penalty_weight != 0.0:
        # Full-sequence ids resident per batch; only DMA'd when penalty is on.
        ids = input_ids_bt.astype(jnp.int32).reshape(B, T, 1)
        in_specs.append(pl.BlockSpec((1, T, 1), lambda b, t, v: (b, 0, 0)))
        inputs.append(ids)
        scratch.append(pltpu.VMEM((1, t_tile), jnp.int32))   # running argmax

    per_token = pl.pallas_call(
        kernel,
        out_shape=jax.ShapeDtypeStruct((B, 1, T), jnp.float32),
        grid_spec=pltpu.PrefetchScalarGridSpec(
            num_scalar_prefetch=0,
            grid=grid,
            in_specs=in_specs,
            out_specs=pl.BlockSpec((1, 1, t_tile), lambda b, t, v: (b, 0, t)),
            scratch_shapes=scratch,
        ),
        compiler_params=pltpu.CompilerParams(
            dimension_semantics=("parallel", "parallel", "arbitrary"),
            vmem_limit_bytes=vmem_limit,
        ),
    )(*inputs)

    # Module does F.cross_entropy(reduction='none', ignore_index=-100) then
    # .mean(): ignored tokens contribute 0 to the numerator but still count in
    # the denominator (all B*T tokens) -> plain mean.
    return jnp.mean(per_token)


def _reference_loss(logits_bvt, labels_bt, input_ids_bt, penalty_weight=0.0):
    """Pure-JAX reference mirroring the PyTorch module."""
    logits = jnp.transpose(logits_bvt, (0, 2, 1)).astype(jnp.float32)  # (B,T,V)
    lse = jax.scipy.special.logsumexp(logits, axis=-1)
    safe = jnp.clip(labels_bt, 0, logits.shape[-1] - 1)
    label_logit = jnp.take_along_axis(logits, safe[..., None], axis=-1)[..., 0]
    ce = jnp.where(labels_bt == -100, 0.0, lse - label_logit)
    if penalty_weight == 0:
        return ce.mean()
    tok = jnp.argmax(logits, axis=-1)
    dup = jnp.any(input_ids_bt[:, None, :] == tok[:, :, None], axis=-1)
    return (ce * (1.0 + dup.astype(jnp.float32) * penalty_weight)).mean()


if __name__ == "__main__":
    key = jax.random.PRNGKey(0)

    def check(B, V, T, note):
        k1, k2, k3 = jax.random.split(jax.random.fold_in(key, 131 * V + T), 3)
        logits = jax.random.normal(k1, (B, V, T), dtype=jnp.float32)
        labels = jax.random.randint(k2, (B, T), 0, V, dtype=jnp.int32)
        labels = labels.at[0, 3].set(-100)          # exercise ignore_index=-100
        input_ids = jax.random.randint(k3, (B, T), 0, V, dtype=jnp.int32)
        for pw in (0.0, 0.5):                       # default + penalty path
            got = jax.block_until_ready(
                cross_entropy_loss(logits, labels, input_ids, pw))
            want = jax.block_until_ready(
                _reference_loss(logits, labels, input_ids, pw))
            assert jnp.allclose(got, want, rtol=1e-5, atol=1e-5), \
                (note, pw, got, want)

    check(2, 128, 8, "small single tile")
    check(2, 4096, 512, "large vocab block, in-kernel strip-mining")
    check(2, 12289, 256, "multiple vocab grid steps + masked vocab tail")
    print("KERNEL_OK")
</pallas_src>

<mosaic_0001>
module attributes {stable_mosaic.version = 11 : i64} {
  func.func @_ce_kernel(%arg0: i32, %arg1: i32, %arg2: i32, %arg3: memref<1x128x8xf32, #tpu.memory_space<vmem>>, %arg4: memref<1x1x8xi32, #tpu.memory_space<vmem>>, %arg5: memref<1x1x8xf32, #tpu.memory_space<vmem>>, %arg6: memref<1x8xf32, #tpu.memory_space<vmem>>, %arg7: memref<1x8xf32, #tpu.memory_space<vmem>>, %arg8: memref<1x8xf32, #tpu.memory_space<vmem>>) attributes {dimension_semantics = [#tpu.dimension_semantics<parallel>, #tpu.dimension_semantics<parallel>, #tpu.dimension_semantics<arbitrary>], iteration_bounds = array<i64: 2, 1, 1>, scalar_prefetch = 0 : i64, scratch_operands = 3 : i64, tpu.core_type = #tpu.core_type<tc>, window_params = [{transform_indices = @transform_0, window_bounds = array<i64: 1, 128, 8>}, {transform_indices = @transform_1, window_bounds = array<i64: 1, 1, 8>}, {transform_indices = @transform_2, window_bounds = array<i64: 1, 1, 8>}]} {
    %c0_i32 = arith.constant 0 : i32
    %0 = arith.cmpi eq, %arg2, %c0_i32 : i32
    %1 = arith.extui %0 : i1 to i32
    %c0_i32_0 = arith.constant 0 : i32
    %2 = arith.cmpi ne, %1, %c0_i32_0 : i32
    scf.if %2 {
      %cst_27 = arith.constant -1.000000e+30 : f32
      %51 = vector.broadcast %cst_27 : f32 to vector<1x8xf32>
      %c0_28 = arith.constant 0 : index
      %c0_29 = arith.constant 0 : index
      %52 = vector.load %arg6[%c0_28, %c0_29] : memref<1x8xf32, #tpu.memory_space<vmem>>, vector<1x8xf32>
      tpu.vector_store %arg6[%c0_28, %c0_29], %51 {strides = array<i32>} : memref<1x8xf32, #tpu.memory_space<vmem>>, vector<1x8xf32>,
      %cst_30 = arith.constant 0.000000e+00 : f32
      %53 = vector.broadcast %cst_30 : f32 to vector<1x8xf32>
      %c0_31 = arith.constant 0 : index
      %c0_32 = arith.constant 0 : index
      %54 = vector.load %arg7[%c0_31, %c0_32] : memref<1x8xf32, #tpu.memory_space<vmem>>, vector<1x8xf32>
      tpu.vector_store %arg7[%c0_31, %c0_32], %53 {strides = array<i32>} : memref<1x8xf32, #tpu.memory_space<vmem>>, vector<1x8xf32>,
      %cst_33 = arith.constant 0.000000e+00 : f32
      %55 = vector.broadcast %cst_33 : f32 to vector<1x8xf32>
      %c0_34 = arith.constant 0 : index
      %c0_35 = arith.constant 0 : index
      %56 = vector.load %arg8[%c0_34, %c0_35] : memref<1x8xf32, #tpu.memory_space<vmem>>, vector<1x8xf32>
      tpu.vector_store %arg8[%c0_34, %c0_35], %55 {strides = array<i32>} : memref<1x8xf32, #tpu.memory_space<vmem>>, vector<1x8xf32>,
    } else {
    }
    %c0 = arith.constant 0 : index
    %c0_1 = arith.constant 0 : index
    %c0_2 = arith.constant 0 : index
    %3 = vector.load %arg4[%c0, %c0_1, %c0_2] : memref<1x1x8xi32, #tpu.memory_space<vmem>>, vector<1x1x8xi32>
    %4 = vector.shape_cast %3 : vector<1x1x8xi32> to vector<1x8xi32>
    %c0_3 = arith.constant 0 : index
    %c0_4 = arith.constant 0 : index
    %5 = vector.load %arg6[%c0_3, %c0_4] : memref<1x8xf32, #tpu.memory_space<vmem>>, vector<1x8xf32>
    %c0_5 = arith.constant 0 : index
    %c0_6 = arith.constant 0 : index
    %6 = vector.load %arg7[%c0_5, %c0_6] : memref<1x8xf32, #tpu.memory_space<vmem>>, vector<1x8xf32>
    %c0_7 = arith.constant 0 : index
    %c0_8 = arith.constant 0 : index
    %7 = vector.load %arg8[%c0_7, %c0_8] : memref<1x8xf32, #tpu.memory_space<vmem>>, vector<1x8xf32>
    %c0_i32_9 = arith.constant 0 : i32
    %c128_i32 = arith.constant 128 : i32
    %8 = arith.muli %c0_i32_9, %c128_i32 : i32
    %9 = tpu.assume_multiple %8, 128 : i32
    %c0_10 = arith.constant 0 : index
    %10 = arith.index_cast %9 : i32 to index
    %c0_11 = arith.constant 0 : index
    %11 = vector.load %arg3[%c0_10, %10, %c0_11] : memref<1x128x8xf32, #tpu.memory_space<vmem>>, vector<1x128x8xf32>
    %12 = vector.shape_cast %11 : vector<1x128x8xf32> to vector<128x8xf32>
    %c128_i32_12 = arith.constant 128 : i32
    %13 = arith.muli %arg2, %c128_i32_12 : i32
    %c128_i32_13 = arith.constant 128 : i32
    %14 = arith.muli %c0_i32_9, %c128_i32_13 : i32
    %15 = arith.addi %13, %14 : i32
    %16 = tpu.iota {dimensions = array<i32: 0>} : vector<128x1xi32>
    %17 = vector.broadcast %15 : i32 to vector<128x1xi32>
    %18 = arith.addi %16, %17 : vector<128x1xi32>
    %c128_i32_14 = arith.constant 128 : i32
    %19 = vector.broadcast %c128_i32_14 : i32 to vector<128x1xi32>
    %20 = arith.cmpi slt, %18, %19 : vector<128x1xi32>
    %cst = arith.constant -1.000000e+30 : f32
    %21 = vector.shape_cast %20 : vector<128x1xi1> to vector<128x1xi1>
    %22 = vector.broadcast %21 : vector<128x1xi1> to vector<128x8xi1>
    %23 = vector.broadcast %cst : f32 to vector<128x8xf32>
    %24 = arith.select %22, %12, %23 : vector<128x8xi1>, vector<128x8xf32>
    %25 = vector.broadcast %18 : vector<128x1xi32> to vector<128x8xi32>
    %26 = vector.broadcast %4 : vector<1x8xi32> to vector<128x8xi32>
    %27 = arith.cmpi eq, %25, %26 : vector<128x8xi32>
    %cst_15 = arith.constant 0.000000e+00 : f32
    %28 = vector.broadcast %cst_15 : f32 to vector<128x8xf32>
    %29 = arith.select %27, %12, %28 : vector<128x8xi1>, vector<128x8xf32>
    %cst_16 = arith.constant dense<0.000000e+00> : vector<8xf32>
    %30 = vector.multi_reduction <add>, %29, %cst_16 [0] : vector<128x8xf32> to vector<8xf32>
    %31 = vector.shape_cast %30 : vector<8xf32> to vector<1x8xf32>
    %32 = arith.addf %7, %31 : vector<1x8xf32>
    %cst_17 = arith.constant dense<0xFF800000> : vector<8xf32>
    %33 = vector.multi_reduction <maximumf>, %24, %cst_17 [0] : vector<128x8xf32> to vector<8xf32>
    %34 = vector.shape_cast %33 : vector<8xf32> to vector<1x8xf32>
    %35 = arith.maximumf %5, %34 : vector<1x8xf32>
    %36 = arith.subf %5, %35 : vector<1x8xf32>
    %37 = math.exp %36 : vector<1x8xf32>
    %38 = arith.mulf %6, %37 : vector<1x8xf32>
    %39 = vector.broadcast %35 : vector<1x8xf32> to vector<128x8xf32>
    %40 = arith.subf %24, %39 : vector<128x8xf32>
    %41 = math.exp %40 : vector<128x8xf32>
    %cst_18 = arith.constant dense<0.000000e+00> : vector<8xf32>
    %42 = vector.multi_reduction <add>, %41, %cst_18 [0] : vector<128x8xf32> to vector<8xf32>
    %43 = vector.shape_cast %42 : vector<8xf32> to vector<1x8xf32>
    %44 = arith.addf %38, %43 : vector<1x8xf32>
    %c1_i32 = arith.constant 1 : i32
    %c0_19 = arith.constant 0 : index
    %c0_20 = arith.constant 0 : index
    %45 = vector.load %arg6[%c0_19, %c0_20] : memref<1x8xf32, #tpu.memory_space<vmem>>, vector<1x8xf32>
    tpu.vector_store %arg6[%c0_19, %c0_20], %35 {strides = array<i32>} : memref<1x8xf32, #tpu.memory_space<vmem>>, vector<1x8xf32>,
    %c0_21 = arith.constant 0 : index
    %c0_22 = arith.constant 0 : index
    %46 = vector.load %arg7[%c0_21, %c0_22] : memref<1x8xf32, #tpu.memory_space<vmem>>, vector<1x8xf32>
    tpu.vector_store %arg7[%c0_21, %c0_22], %44 {strides = array<i32>} : memref<1x8xf32, #tpu.memory_space<vmem>>, vector<1x8xf32>,
    %c0_23 = arith.constant 0 : index
    %c0_24 = arith.constant 0 : index
    %47 = vector.load %arg8[%c0_23, %c0_24] : memref<1x8xf32, #tpu.memory_space<vmem>>, vector<1x8xf32>
    tpu.vector_store %arg8[%c0_23, %c0_24], %32 {strides = array<i32>} : memref<1x8xf32, #tpu.memory_space<vmem>>, vector<1x8xf32>,
    %c0_i32_25 = arith.constant 0 : i32
    %48 = arith.cmpi eq, %arg2, %c0_i32_25 : i32
    %49 = arith.extui %48 : i1 to i32
    %c0_i32_26 = arith.constant 0 : i32
    %50 = arith.cmpi ne, %49, %c0_i32_26 : i32
    scf.if %50 {
      %c0_27 = arith.constant 0 : index
      %c0_28 = arith.constant 0 : index
      %51 = vector.load %arg6[%c0_27, %c0_28] : memref<1x8xf32, #tpu.memory_space<vmem>>, vector<1x8xf32>
      %c0_29 = arith.constant 0 : index
      %c0_30 = arith.constant 0 : index
      %52 = vector.load %arg7[%c0_29, %c0_30] : memref<1x8xf32, #tpu.memory_space<vmem>>, vector<1x8xf32>
      %53 = math.log %52 : vector<1x8xf32>
      %54 = arith.addf %51, %53 : vector<1x8xf32>
      %c-100_i32 = arith.constant -100 : i32
      %55 = vector.broadcast %c-100_i32 : i32 to vector<1x8xi32>
      %56 = arith.cmpi eq, %4, %55 : vector<1x8xi32>
      %c0_31 = arith.constant 0 : index
      %c0_32 = arith.constant 0 : index
      %57 = vector.load %arg8[%c0_31, %c0_32] : memref<1x8xf32, #tpu.memory_space<vmem>>, vector<1x8xf32>
      %58 = arith.subf %54, %57 : vector<1x8xf32>
      %cst_33 = arith.constant 0.000000e+00 : f32
      %59 = vector.broadcast %cst_33 : f32 to vector<1x8xf32>
      %60 = arith.select %56, %59, %58 : vector<1x8xi1>, vector<1x8xf32>
      %c0_34 = arith.constant 0 : index
      %c0_35 = arith.constant 0 : index
      %c0_36 = arith.constant 0 : index
      %61 = vector.load %arg5[%c0_34, %c0_35, %c0_36] : memref<1x1x8xf32, #tpu.memory_space<vmem>>, vector<1x1x8xf32>
      %62 = vector.shape_cast %61 : vector<1x1x8xf32> to vector<1x8xf32>
      %63 = vector.shape_cast %60 : vector<1x8xf32> to vector<1x1x8xf32>
      tpu.vector_store %arg5[%c0_34, %c0_35, %c0_36], %63 {strides = array<i32>} : memref<1x1x8xf32, #tpu.memory_space<vmem>>, vector<1x1x8xf32>,
    } else {
    }
    return
  }
  func.func @transform_0(%arg0: i32, %arg1: i32, %arg2: i32) -> (i32, i32, i32) {
    %c0_i32 = arith.constant 0 : i32
    return %arg0, %arg2, %arg1 : i32, i32, i32
  }
  func.func @transform_1(%arg0: i32, %arg1: i32, %arg2: i32) -> (i32, i32, i32) {
    %c0_i32 = arith.constant 0 : i32
    %c0_i32_0 = arith.constant 0 : i32
    return %arg0, %c0_i32, %arg1 : i32, i32, i32
  }
  func.func @transform_2(%arg0: i32, %arg1: i32, %arg2: i32) -> (i32, i32, i32) {
    %c0_i32 = arith.constant 0 : i32
    %c0_i32_0 = arith.constant 0 : i32
    return %arg0, %c0_i32, %arg1 : i32, i32, i32
  }
}

</mosaic_0001>

<llo_original>
// kernel: tpu_custom_call.1
$region0: #{tpu_custom_call.1}
  #allocation0 [shape = 'u32[]', space=smem, size = 0x4, offset = 0x4, fixed_abs, tag = 'smem constant byte address 0x4 - core index']
  #allocation1 [shape = 'u32[144,128]{1,0:T(1,128)}', space=vmem, size = 0x12000, scoped, tag = 'internal scratch']
  #allocation2 [shape = 'f32[1,8]{1,0:T(1,128)}', space=vmem, size = 0x200, scoped, tag = 'scratch operand']
  #allocation3 [shape = 'f32[1,8]{1,0:T(1,128)}', space=vmem, size = 0x200, scoped, tag = 'scratch operand']
  #allocation4 [shape = 'f32[1,8]{1,0:T(1,128)}', space=vmem, size = 0x200, scoped, tag = 'scratch operand']
  %s0 = inlined_call_operand.vmem [shape: f32[2,128,8], index: 0, kind: input, shape index: {}]
  %s1 = inlined_call_operand.vmem [shape: s32[2,1,8], index: 1, kind: input, shape index: {}]
  %s2 = inlined_call_operand.hbm [shape: f32[2,1,8], index: 2, kind: output, shape index: {}]
  %s3 = sld [smem:[#allocation0]]
  $region49: #{tpu_custom_call.1} parent=0
    _
  %s5 = ssub.s32 1, %s3
  %s6 = scalar_select 0, %s5, %s3
  $region1: #{tpu_custom_call.1} parent=0
    #allocation5 [shape = 'u8[1024]{0}', space=vmem, size = 0x400, scoped, tag = 'output window, operand 0']
    #allocation6 [shape = 's32[2]{0}', space=sflag, size = 0x8, scoped, tag = 'scoped memory for tpu_custom_call.1']
    %7 = vsyncpa [#allocation6], 0
    %s8 = scalar_lea.sflag [#allocation6], 1
    %9 = vsyncpa %s8, 0
    loop: start=0, step=1, limit=4
    $region2: #{tpu_custom_call.1} parent=1 // loop_pre_header
      _
    $region3: #{tpu_custom_call.1} parent=1 // loop_header
      %s11 = sphi 0, %s15
      %p12 = scmp.ge.s32.totalorder %s11, 4
      %s18 = sphi 0, %s37
      %s19 = sphi 0, %s33
      %s20 = sphi 0, %s29
      %s21 = sphi 0, %s18
      %s22 = sphi 0, %s19
      %s23 = sphi 0, %s20
      %s24 = sphi 0, %s21
      %s25 = sphi 0, %s22
      %s26 = sphi 0, %s23
      %s44 = sphi 0, %s46
      %s47 = sphi 0, %s44
      %s48 = sphi 0, %s47
      %s64 = sphi 0, %s48
      %s72 = sphi 0, %s74
      %s75 = sphi 0, %s72
      %s76 = sphi 0, %s75
      %s92 = sphi 0, %s76
      %s100 = sphi 0, %s102
      %s103 = sphi 0, %s100
      %s104 = sphi 0, %s103
      %s120 = sphi 0, %s104
    $region4: #{tpu_custom_call.1} parent=1 // loop_header_branch
      %14 = sbr.rel (%p12) target = $region8
    $region5: #{tpu_custom_call.1} parent=1 // loop_body
      %s16 = ssub.s32 %s11, 1
      %s17 = ssub.s32 %s11, 2
      %s27 = sadd.s32 1, %s20
      %p28 = scmp.ge.s32.totalorder %s27, 1
      %s29 = scalar_select %p28, 0, %s27
      %s30 = sadd.s32 1, %s19
      %s31 = scalar_select %p28, %s30, %s19
      %p32 = scmp.ge.s32.totalorder %s31, 1
      %s33 = scalar_select %p32, 0, %s31
      %s34 = sadd.s32 1, %s18
      %s35 = scalar_select %p32, %s34, %s18
      %p36 = scmp.ge.s32.totalorder %s35, 2
      %s37 = scalar_select %p36, 0, %s35
      %s38 = ssub.s32 %s18, %s37
      %s39 = ssub.s32 %s20, %s29
      %s40 = sor.u32 %s38, %s39
      %s41 = ssub.s32 %s19, %s33
      %s42 = sor.u32 %s40, %s41
      %p43 = scmp.eq.s32.totalorder %s42, 0
      %s45 = sadd.s32 %s44, 1
      %s46 = scalar_select %p43, %s44, %s45
      %p49 = pneg %p43
      %p50 = scmp.eq.s32.totalorder %s11, 1
      %p51 = por %p49, %p50
      %p52 = scmp.ne.s32.totalorder %s44, %s47
      %p53 = scmp.eq.s32.totalorder %s11, 0
      %p54 = por %p52, %p53
      %p55 = scmp.ne.s32.totalorder %s44, %s47
      %p56 = scmp.eq.s32.totalorder %s16, 1
      %p57 = por %p55, %p56
      %p58 = scmp.ne.s32.totalorder %s47, %s48
      %p59 = scmp.eq.s32.totalorder %s16, 0
      %p60 = por %p58, %p59
      %p61 = scmp.ne.s32.totalorder %s47, %s48
      %p62 = scmp.eq.s32.totalorder %s17, 1
      %p63 = por %p61, %p62
      %p65 = scmp.ne.s32.totalorder %s48, %s64
      %p66 = scmp.eq.s32.totalorder %s17, 0
      %p67 = por %p65, %p66
      %s68 = ssub.s32 %s18, %s37
      %s69 = ssub.s32 %s19, %s33
      %s70 = sor.u32 %s68, %s69
      %p71 = scmp.eq.s32.totalorder %s70, 0
      %s73 = sadd.s32 %s72, 1
      %s74 = scalar_select %p71, %s72, %s73
      %p77 = pneg %p71
      %p78 = scmp.eq.s32.totalorder %s11, 1
      %p79 = por %p77, %p78
      %p80 = scmp.ne.s32.totalorder %s72, %s75
      %p81 = scmp.eq.s32.totalorder %s11, 0
      %p82 = por %p80, %p81
      %p83 = scmp.ne.s32.totalorder %s72, %s75
      %p84 = scmp.eq.s32.totalorder %s16, 1
      %p85 = por %p83, %p84
      %p86 = scmp.ne.s32.totalorder %s75, %s76
      %p87 = scmp.eq.s32.totalorder %s16, 0
      %p88 = por %p86, %p87
      %p89 = scmp.ne.s32.totalorder %s75, %s76
      %p90 = scmp.eq.s32.totalorder %s17, 1
      %p91 = por %p89, %p90
      %p93 = scmp.ne.s32.totalorder %s76, %s92
      %p94 = scmp.eq.s32.totalorder %s17, 0
      %p95 = por %p93, %p94
      %s96 = ssub.s32 %s18, %s37
      %s97 = ssub.s32 %s19, %s33
      %s98 = sor.u32 %s96, %s97
      %p99 = scmp.eq.s32.totalorder %s98, 0
      %s101 = sadd.s32 %s100, 1
      %s102 = scalar_select %p99, %s100, %s101
      %p105 = pneg %p99
      %p106 = scmp.eq.s32.totalorder %s11, 1
      %p107 = por %p105, %p106
      %p108 = scmp.ne.s32.totalorder %s100, %s103
      %p109 = scmp.eq.s32.totalorder %s11, 0
      %p110 = por %p108, %p109
      %p111 = scmp.ne.s32.totalorder %s100, %s103
      %p112 = scmp.eq.s32.totalorder %s16, 1
      %p113 = por %p111, %p112
      %p114 = scmp.ne.s32.totalorder %s103, %s104
      %p115 = scmp.eq.s32.totalorder %s16, 0
      %p116 = por %p114, %p115
      %p117 = scmp.ne.s32.totalorder %s103, %s104
      %p118 = scmp.eq.s32.totalorder %s17, 1
      %p119 = por %p117, %p118
      %p121 = scmp.ne.s32.totalorder %s104, %s120
      %p122 = scmp.eq.s32.totalorder %s17, 0
      %p123 = por %p121, %p122
      %p124 = scmp.le.s32.totalorder 1, %s11
      %p125 = scmp.lt.s32.totalorder %s11, 3
      %p126 = pnand %p124, %p125
      %p127 = pneg %p126
      // Predicated region
      $region9: #{tpu_custom_call.1} parent=5 // pred_check
        _
      $region10: #{tpu_custom_call.1} parent=5 // pred_check_branch
        %129 = sbr.rel (%p126) target = $region12
      $region11: #{tpu_custom_call.1} parent=5 // pred_region
        %s130 = ssub.s32 %s11, 1
      $region12: #{tpu_custom_call.1} parent=5 // pred_fallthru
        _
      %p131 = scmp.lt.s32.totalorder %s11, 2
      // Predicated region
      $region13: #{tpu_custom_call.1} parent=5 // pred_check
        %p132 = pneg %p131
      $region14: #{tpu_custom_call.1} parent=5 // pred_check_branch
        %134 = sbr.rel (%p132) target = $region16
      $region15: #{tpu_custom_call.1} parent=5 // pred_region
        // Predicated region
        $region17: #{tpu_custom_call.1} parent=15 // pred_check
          %p135 = pneg %p54
        $region18: #{tpu_custom_call.1} parent=15 // pred_check_branch
          %137 = sbr.rel (%p135) target = $region20
        $region19: #{tpu_custom_call.1} parent=15 // pred_region
          %s138 = smul.u32 16, %s20
          %p139 = scmp.lt.s32.totalorder %s18, 1
          %s140 = scalar_select %p139, %s18, 1
          %p141 = scmp.lt.s32.totalorder %s138, 15
          %s142 = scalar_select %p141, %s138, 15
          %p143 = scmp.lt.s32.totalorder %s19, 0
          %s144 = scalar_select %p143, %s19, 0
          %s145 = sadd.s32 %s144, %s142
          %s146 = smul.addr %s140, 16
          %s147 = sadd.s32 %s145, %s146
          %s148 = smul.addr %s147, 8
          %s149 = scalar_lea.vmem %s0, %s148
          %s150 = smul.u32 16, %s20
        $region20: #{tpu_custom_call.1} parent=15 // pred_fallthru
          _
        // Predicated region
        $region21: #{tpu_custom_call.1} parent=15 // pred_check
          %p151 = pneg %p82
        $region22: #{tpu_custom_call.1} parent=15 // pred_check_branch
          %153 = sbr.rel (%p151) target = $region24
        $region23: #{tpu_custom_call.1} parent=15 // pred_region
          %p154 = scmp.lt.s32.totalorder %s18, 1
          %s155 = scalar_select %p154, %s18, 1
          %p156 = scmp.lt.s32.totalorder %s19, 0
          %s157 = scalar_select %p156, %s19, 0
          %s158 = sadd.s32 %s157, %s155
          %s159 = scalar_lea.vmem %s1, %s158
        $region24: #{tpu_custom_call.1} parent=15 // pred_fallthru
          _
      $region16: #{tpu_custom_call.1} parent=5 // pred_fallthru
        _
      %p160 = scmp.le.s32.totalorder 1, %s11
      %p161 = scmp.lt.s32.totalorder %s11, 3
      %p162 = pnand %p160, %p161
      %p163 = pneg %p162
      // Predicated region
      $region25: #{tpu_custom_call.1} parent=5 // pred_check
        _
      $region26: #{tpu_custom_call.1} parent=5 // pred_check_branch
        %165 = sbr.rel (%p162) target = $region28
      $region27: #{tpu_custom_call.1} parent=5 // pred_region
        %s166 = ssub.s32 %s11, 1
        %s167 = smul.u32 16, %s23
        %p168 = scmp.lt.s32.totalorder %s21, 1
        %s169 = scalar_select %p168, %s21, 1
        %p170 = scmp.lt.s32.totalorder %s167, 15
        %s171 = scalar_select %p170, %s167, 15
        %p172 = scmp.lt.s32.totalorder %s22, 0
        %s173 = scalar_select %p172, %s22, 0
        %s174 = sadd.s32 %s173, %s171
        %s175 = smul.addr %s169, 16
        %s176 = sadd.s32 %s174, %s175
        %s177 = smul.addr %s176, 8
        %s178 = scalar_lea.vmem %s0, %s177
        %p179 = pneg %p60
        %p180 = pneg %p57
        %p181 = scmp.lt.s32.totalorder %s21, 1
        %s182 = scalar_select %p181, %s21, 1
        %p183 = scmp.lt.s32.totalorder %s22, 0
        %s184 = scalar_select %p183, %s22, 0
        %s185 = sadd.s32 %s184, %s182
        %s186 = scalar_lea.vmem %s1, %s185
        %p187 = pneg %p88
        %p188 = pneg %p85
        %p189 = pneg %p116
        %p190 = pneg %p113
        %s191 = sand.u32 %s103, 1
        %s192 = scalar_lea.sflag [#allocation6], %s191
        %s193 = sand.u32 %s103, 1
        %s194 = scalar_lea.vmem [#allocation5], %s193
        %s195 = smul.u32 16, %s23
        %p196 = scmp.lt.s32.totalorder %s21, 1
        %s197 = scalar_select %p196, %s21, 1
        %p198 = scmp.lt.s32.totalorder %s195, 15
        %s199 = scalar_select %p198, %s195, 15
        %p200 = scmp.lt.s32.totalorder %s22, 0
        %s201 = scalar_select %p200, %s22, 0
        %s202 = sadd.s32 %s201, %s199
        %s203 = smul.addr %s197, 16
        %s204 = sadd.s32 %s202, %s203
        %s205 = smul.addr %s204, 8
        %s206 = scalar_lea.vmem %s0, %s205
        %s207 = smul.u32 16, %s23
        %p208 = scmp.lt.s32.totalorder %s21, 1
        %s209 = scalar_select %p208, %s21, 1
        %p210 = scmp.lt.s32.totalorder %s22, 0
        %s211 = scalar_select %p210, %s22, 0
        %s212 = sadd.s32 %s211, %s209
        %s213 = scalar_lea.vmem %s1, %s212
        %p214 = scmp.eq.s32.totalorder %s23, 0
        // Predicated region
        $region29: #{tpu_custom_call.1} parent=27 // pred_check
          %p215 = pneg %p214
        $region30: #{tpu_custom_call.1} parent=27 // pred_check_branch
          %217 = sbr.rel (%p215) target = $region32
        $region31: #{tpu_custom_call.1} parent=27 // pred_region
          %vm218 = vcmask 57344
          %219 = vst.msk [vmem:[#allocation2] sm:$0x1] %vm218, -1e+30
          %220 = vst.msk [vmem:[#allocation3] sm:$0x1] %vm218, 0.0
          %221 = vst.msk [vmem:[#allocation4] sm:$0x1] %vm218, 0.0
        $region32: #{tpu_custom_call.1} parent=27 // pred_fallthru
          _
        %v222 = vld [vmem:[%s213] sm:$0x1]
        %v223 = vld [vmem:[#allocation2] sm:$0x1]
        %v224 = vld [vmem:[#allocation3] sm:$0x1]
        %v225 = vld [vmem:[#allocation4] sm:$0x1]
        %v226 = vld [vmem:[%s206] sm:$0xff]
        %v227 = vld [vmem:[%s206 + $0x8] sm:$0xff]
        %v228 = vld [vmem:[%s206 + $0x10] sm:$0xff]
        %v229 = vld [vmem:[%s206 + $0x18] sm:$0xff]
        %v230 = vld [vmem:[%s206 + $0x20] sm:$0xff]
        %v231 = vld [vmem:[%s206 + $0x28] sm:$0xff]
        %v232 = vld [vmem:[%s206 + $0x30] sm:$0xff]
        %v233 = vld [vmem:[%s206 + $0x38] sm:$0xff]
        %v234 = vld [vmem:[%s206 + $0x40] sm:$0xff]
        %v235 = vld [vmem:[%s206 + $0x48] sm:$0xff]
        %v236 = vld [vmem:[%s206 + $0x50] sm:$0xff]
        %v237 = vld [vmem:[%s206 + $0x58] sm:$0xff]
        %v238 = vld [vmem:[%s206 + $0x60] sm:$0xff]
        %v239 = vld [vmem:[%s206 + $0x68] sm:$0xff]
        %v240 = vld [vmem:[%s206 + $0x70] sm:$0xff]
        %v241 = vld [vmem:[%s206 + $0x78] sm:$0xff]
        %s242 = smul.u32 %s23, 128
        %v243 = vlaneseq
        %v244 = vshrl.u32 %v243, 7
        %v245 = vadd.s32 %v244, 8
        %v246 = vadd.s32 %v244, 16
        %v247 = vadd.s32 %v244, 24
        %v248 = vadd.s32 %v244, 32
        %v249 = vadd.s32 %v244, 40
        %v250 = vadd.s32 %v244, 48
        %v251 = vadd.s32 %v244, 56
        %v252 = vadd.s32 %v244, 64
        %v253 = vadd.s32 %v244, 72
        %v254 = vadd.s32 %v244, 80
        %v255 = vadd.s32 %v244, 88
        %v256 = vadd.s32 %v244, 96
        %v257 = vadd.s32 %v244, 104
        %v258 = vadd.s32 %v244, 112
        %v259 = vadd.s32 %v244, 120
        %v260 = vstv %s242
        %v261 = vadd.s32 %v244, %v260
        %v262 = vadd.s32 %v245, %v260
        %v263 = vadd.s32 %v246, %v260
        %v264 = vadd.s32 %v247, %v260
        %v265 = vadd.s32 %v248, %v260
        %v266 = vadd.s32 %v249, %v260
        %v267 = vadd.s32 %v250, %v260
        %v268 = vadd.s32 %v251, %v260
        %v269 = vadd.s32 %v252, %v260
        %v270 = vadd.s32 %v253, %v260
        %v271 = vadd.s32 %v254, %v260
        %v272 = vadd.s32 %v255, %v260
        %v273 = vadd.s32 %v256, %v260
        %v274 = vadd.s32 %v257, %v260
        %v275 = vadd.s32 %v258, %v260
        %v276 = vadd.s32 %v259, %v260
        %vm277 = vcmp.lt.s32.totalorder %v261, 128
        %vm278 = vcmp.lt.s32.totalorder %v262, 128
        %vm279 = vcmp.lt.s32.totalorder %v263, 128
        %vm280 = vcmp.lt.s32.totalorder %v264, 128
        %vm281 = vcmp.lt.s32.totalorder %v265, 128
        %vm282 = vcmp.lt.s32.totalorder %v266, 128
        %vm283 = vcmp.lt.s32.totalorder %v267, 128
        %vm284 = vcmp.lt.s32.totalorder %v268, 128
        %vm285 = vcmp.lt.s32.totalorder %v269, 128
        %vm286 = vcmp.lt.s32.totalorder %v270, 128
        %vm287 = vcmp.lt.s32.totalorder %v271, 128
        %vm288 = vcmp.lt.s32.totalorder %v272, 128
        %vm289 = vcmp.lt.s32.totalorder %v273, 128
        %vm290 = vcmp.lt.s32.totalorder %v274, 128
        %vm291 = vcmp.lt.s32.totalorder %v275, 128
        %vm292 = vcmp.lt.s32.totalorder %v276, 128
        %v293 = vsel %vm277, 1, 0
        %v294 = vsel %vm278, 1, 0
        %v295 = vsel %vm279, 1, 0
        %v296 = vsel %vm280, 1, 0
        %v297 = vsel %vm281, 1, 0
        %v298 = vsel %vm282, 1, 0
        %v299 = vsel %vm283, 1, 0
        %v300 = vsel %vm284, 1, 0
        %v301 = vsel %vm285, 1, 0
        %v302 = vsel %vm286, 1, 0
        %v303 = vsel %vm287, 1, 0
        %v304 = vsel %vm288, 1, 0
        %v305 = vsel %vm289, 1, 0
        %v306 = vsel %vm290, 1, 0
        %v307 = vsel %vm291, 1, 0
        %v308 = vsel %vm292, 1, 0
        %vm309 = vcmp.eq.s32.totalorder %v293, 1
        %vm310 = vcmp.eq.s32.totalorder %v294, 1
        %vm311 = vcmp.eq.s32.totalorder %v295, 1
        %vm312 = vcmp.eq.s32.totalorder %v296, 1
        %vm313 = vcmp.eq.s32.totalorder %v297, 1
        %vm314 = vcmp.eq.s32.totalorder %v298, 1
        %vm315 = vcmp.eq.s32.totalorder %v299, 1
        %vm316 = vcmp.eq.s32.totalorder %v300, 1
        %vm317 = vcmp.eq.s32.totalorder %v301, 1
        %vm318 = vcmp.eq.s32.totalorder %v302, 1
        %vm319 = vcmp.eq.s32.totalorder %v303, 1
        %vm320 = vcmp.eq.s32.totalorder %v304, 1
        %vm321 = vcmp.eq.s32.totalorder %v305, 1
        %vm322 = vcmp.eq.s32.totalorder %v306, 1
        %vm323 = vcmp.eq.s32.totalorder %v307, 1
        %vm324 = vcmp.eq.s32.totalorder %v308, 1
        %v325 = vsel %vm309, %v226, -1e+30
        %v326 = vsel %vm310, %v227, -1e+30
        %v327 = vsel %vm311, %v228, -1e+30
        %v328 = vsel %vm312, %v229, -1e+30
        %v329 = vsel %vm313, %v230, -1e+30
        %v330 = vsel %vm314, %v231, -1e+30
        %v331 = vsel %vm315, %v232, -1e+30
        %v332 = vsel %vm316, %v233, -1e+30
        %v333 = vsel %vm317, %v234, -1e+30
        %v334 = vsel %vm318, %v235, -1e+30
        %v335 = vsel %vm319, %v236, -1e+30
        %v336 = vsel %vm320, %v237, -1e+30
        %v337 = vsel %vm321, %v238, -1e+30
        %v338 = vsel %vm322, %v239, -1e+30
        %v339 = vsel %vm323, %v240, -1e+30
        %v340 = vsel %vm324, %v241, -1e+30
        %v341 = vlaneseq
        %v342 = vshrl.u32 %v341, 7
        %v343 = vsub.s32 0, %v342
        %v344 = vrot.slane %v222, %v343
        %vm345 = vcmp.eq.s32.totalorder %v261, %v344
        %vm346 = vcmp.eq.s32.totalorder %v262, %v344
        %vm347 = vcmp.eq.s32.totalorder %v263, %v344
        %vm348 = vcmp.eq.s32.totalorder %v264, %v344
        %vm349 = vcmp.eq.s32.totalorder %v265, %v344
        %vm350 = vcmp.eq.s32.totalorder %v266, %v344
        %vm351 = vcmp.eq.s32.totalorder %v267, %v344
        %vm352 = vcmp.eq.s32.totalorder %v268, %v344
        %vm353 = vcmp.eq.s32.totalorder %v269, %v344
        %vm354 = vcmp.eq.s32.totalorder %v270, %v344
        %vm355 = vcmp.eq.s32.totalorder %v271, %v344
        %vm356 = vcmp.eq.s32.totalorder %v272, %v344
        %vm357 = vcmp.eq.s32.totalorder %v273, %v344
        %vm358 = vcmp.eq.s32.totalorder %v274, %v344
        %vm359 = vcmp.eq.s32.totalorder %v275, %v344
        %vm360 = vcmp.eq.s32.totalorder %v276, %v344
        %v361 = vsel %vm345, %v226, 0.0
        %v362 = vsel %vm346, %v227, 0.0
        %v363 = vsel %vm347, %v228, 0.0
        %v364 = vsel %vm348, %v229, 0.0
        %v365 = vsel %vm349, %v230, 0.0
        %v366 = vsel %vm350, %v231, 0.0
        %v367 = vsel %vm351, %v232, 0.0
        %v368 = vsel %vm352, %v233, 0.0
        %v369 = vsel %vm353, %v234, 0.0
        %v370 = vsel %vm354, %v235, 0.0
        %v371 = vsel %vm355, %v236, 0.0
        %v372 = vsel %vm356, %v237, 0.0
        %v373 = vsel %vm357, %v238, 0.0
        %v374 = vsel %vm358, %v239, 0.0
        %v375 = vsel %vm359, %v240, 0.0
        %v376 = vsel %vm360, %v241, 0.0
        %vm377 = vcmask 64512
        %v378 = vsel %vm377, %v361, 0.0
        %v379 = vsel %vm377, %v362, 0.0
        %v380 = vadd.f32 %v378, %v379
        %v381 = vsel %vm377, %v363, 0.0
        %v382 = vadd.f32 %v380, %v381
        %v383 = vsel %vm377, %v364, 0.0
        %v384 = vadd.f32 %v382, %v383
        %v385 = vsel %vm377, %v365, 0.0
        %v386 = vadd.f32 %v384, %v385
        %v387 = vsel %vm377, %v366, 0.0
        %v388 = vadd.f32 %v386, %v387
        %v389 = vsel %vm377, %v367, 0.0
        %v390 = vadd.f32 %v388, %v389
        %v391 = vsel %vm377, %v368, 0.0
        %v392 = vadd.f32 %v390, %v391
        %v393 = vsel %vm377, %v369, 0.0
        %v394 = vadd.f32 %v392, %v393
        %v395 = vsel %vm377, %v370, 0.0
        %v396 = vadd.f32 %v394, %v395
        %v397 = vsel %vm377, %v371, 0.0
        %v398 = vadd.f32 %v396, %v397
        %v399 = vsel %vm377, %v372, 0.0
        %v400 = vadd.f32 %v398, %v399
        %v401 = vsel %vm377, %v373, 0.0
        %v402 = vadd.f32 %v400, %v401
        %v403 = vsel %vm377, %v374, 0.0
        %v404 = vadd.f32 %v402, %v403
        %v405 = vsel %vm377, %v375, 0.0
        %v406 = vadd.f32 %v404, %v405
        %v407 = vsel %vm377, %v376, 0.0
        %v408 = vadd.f32 %v406, %v407
        %v409 = vrot.slane %v408, 4
        %v410 = vadd.f32 %v408, %v409
        %v411 = vrot.slane %v410, 2
        %v412 = vadd.f32 %v410, %v411
        %v413 = vrot.slane %v412, 1
        %v414 = vadd.f32 %v412, %v413
        %v415 = vadd.f32 %v225, %v414
        %v416 = vsel %vm377, %v325, -inf
        %v417 = vsel %vm377, %v326, -inf
        %v418 = vsel %vm377, %v327, -inf
        %v419 = vsel %vm377, %v328, -inf
        %v420 = vsel %vm377, %v329, -inf
        %v421 = vmax.f32 %v416, %v420
        %v422 = vsel %vm377, %v330, -inf
        %v423 = vmax.f32 %v417, %v422
        %v424 = vsel %vm377, %v331, -inf
        %v425 = vmax.f32 %v418, %v424
        %v426 = vsel %vm377, %v332, -inf
        %v427 = vmax.f32 %v419, %v426
        %v428 = vsel %vm377, %v333, -inf
        %v429 = vmax.f32 %v421, %v428
        %v430 = vsel %vm377, %v334, -inf
        %v431 = vmax.f32 %v423, %v430
        %v432 = vsel %vm377, %v335, -inf
        %v433 = vmax.f32 %v425, %v432
        %v434 = vsel %vm377, %v336, -inf
        %v435 = vmax.f32 %v427, %v434
        %v436 = vsel %vm377, %v337, -inf
        %v437 = vmax.f32 %v429, %v436
        %v438 = vsel %vm377, %v338, -inf
        %v439 = vmax.f32 %v431, %v438
        %v440 = vsel %vm377, %v339, -inf
        %v441 = vmax.f32 %v433, %v440
        %v442 = vsel %vm377, %v340, -inf
        %v443 = vmax.f32 %v435, %v442
        %v444 = vmax.f32 %v437, %v439
        %v445 = vmax.f32 %v441, %v443
        %v446 = vmax.f32 %v444, %v445
        %v447 = vrot.slane %v446, 4
        %v448 = vmax.f32 %v446, %v447
        %v449 = vrot.slane %v448, 2
        %v450 = vmax.f32 %v448, %v449
        %v451 = vrot.slane %v450, 1
        %v452 = vmax.f32 %v450, %v451
        %v453 = vmax.f32 %v223, %v452
        %v454 = vsub.f32 %v223, %v453
        %v455 = vmul.f32 %v454, 1.442695
        %v456 = vpow.pop %v455
        %v457 = vmul.f32 %v224, %v456
        %v459 = vlaneseq
        %v460 = vshrl.u32 %v459, 7
        %v461 = vsub.s32 0, %v460
        %v462 = vrot.slane %v453, %v461
        %v464 = vsub.f32 %v325, %v462
        %v465 = vsub.f32 %v326, %v462
        %v466 = vsub.f32 %v327, %v462
        %v467 = vsub.f32 %v328, %v462
        %v468 = vsub.f32 %v329, %v462
        %v469 = vsub.f32 %v330, %v462
        %v470 = vsub.f32 %v331, %v462
        %v471 = vsub.f32 %v332, %v462
        %v472 = vsub.f32 %v333, %v462
        %v473 = vsub.f32 %v334, %v462
        %v474 = vsub.f32 %v335, %v462
        %v475 = vsub.f32 %v336, %v462
        %v476 = vsub.f32 %v337, %v462
        %v477 = vsub.f32 %v338, %v462
        %v478 = vsub.f32 %v339, %v462
        %v479 = vsub.f32 %v340, %v462
        %v480 = vmul.f32 %v464, 1.442695
        %v481 = vpow.pop %v480
        %v482 = vmul.f32 %v465, 1.442695
        %v483 = vpow.pop %v482
        %v484 = vmul.f32 %v466, 1.442695
        %v485 = vpow.pop %v484
        %v486 = vmul.f32 %v467, 1.442695
        %v487 = vpow.pop %v486
        %v488 = vmul.f32 %v468, 1.442695
        %v489 = vpow.pop %v488
        %v490 = vmul.f32 %v469, 1.442695
        %v491 = vpow.pop %v490
        %v492 = vmul.f32 %v470, 1.442695
        %v493 = vpow.pop %v492
        %v494 = vmul.f32 %v471, 1.442695
        %v495 = vpow.pop %v494
        %v496 = vmul.f32 %v472, 1.442695
        %v497 = vpow.pop %v496
        %v498 = vmul.f32 %v473, 1.442695
        %v499 = vpow.pop %v498
        %v500 = vmul.f32 %v474, 1.442695
        %v501 = vpow.pop %v500
        %v502 = vmul.f32 %v475, 1.442695
        %v503 = vpow.pop %v502
        %v504 = vmul.f32 %v476, 1.442695
        %v505 = vpow.pop %v504
        %v506 = vmul.f32 %v477, 1.442695
        %v507 = vpow.pop %v506
        %v508 = vmul.f32 %v478, 1.442695
        %v509 = vpow.pop %v508
        %v510 = vmul.f32 %v479, 1.442695
        %v511 = vpow.pop %v510
        %v512 = vsel %vm377, %v481, 0.0
        %v513 = vsel %vm377, %v483, 0.0
        %v514 = vadd.f32 %v512, %v513
        %v515 = vsel %vm377, %v485, 0.0
        %v516 = vadd.f32 %v514, %v515
        %v517 = vsel %vm377, %v487, 0.0
        %v518 = vadd.f32 %v516, %v517
        %v519 = vsel %vm377, %v489, 0.0
        %v520 = vadd.f32 %v518, %v519
        %v521 = vsel %vm377, %v491, 0.0
        %v522 = vadd.f32 %v520, %v521
        %v523 = vsel %vm377, %v493, 0.0
        %v524 = vadd.f32 %v522, %v523
        %v525 = vsel %vm377, %v495, 0.0
        %v526 = vadd.f32 %v524, %v525
        %v527 = vsel %vm377, %v497, 0.0
        %v528 = vadd.f32 %v526, %v527
        %v529 = vsel %vm377, %v499, 0.0
        %v530 = vadd.f32 %v528, %v529
        %v531 = vsel %vm377, %v501, 0.0
        %v532 = vadd.f32 %v530, %v531
        %v533 = vsel %vm377, %v503, 0.0
        %v534 = vadd.f32 %v532, %v533
        %v535 = vsel %vm377, %v505, 0.0
        %v536 = vadd.f32 %v534, %v535
        %v537 = vsel %vm377, %v507, 0.0
        %v538 = vadd.f32 %v536, %v537
        %v539 = vsel %vm377, %v509, 0.0
        %v540 = vadd.f32 %v538, %v539
        %v541 = vsel %vm377, %v511, 0.0
        %v542 = vadd.f32 %v540, %v541
        %v543 = vrot.slane %v542, 4
        %v544 = vadd.f32 %v542, %v543
        %v545 = vrot.slane %v544, 2
        %v546 = vadd.f32 %v544, %v545
        %v547 = vrot.slane %v546, 1
        %v548 = vadd.f32 %v546, %v547
        %v549 = vadd.f32 %v457, %v548
        %vm550 = vcmask 57344
        %551 = vst.msk [vmem:[#allocation2] sm:$0x1] %vm550, %v453
        %552 = vst.msk [vmem:[#allocation3] sm:$0x1] %vm550, %v549
        %553 = vst.msk [vmem:[#allocation4] sm:$0x1] %vm550, %v415
        // Predicated region
        $region33: #{tpu_custom_call.1} parent=27 // pred_check
          %p554 = pneg %p214
        $region34: #{tpu_custom_call.1} parent=27 // pred_check_branch
          %556 = sbr.rel (%p554) target = $region36
        $region35: #{tpu_custom_call.1} parent=27 // pred_region
          %v557 = vld [vmem:[#allocation2] sm:$0x1]
          %v558 = vld [vmem:[#allocation3] sm:$0x1]
          %v559 = vlog2.pop %v558
          %v560 = vmul.f32 %v559, 0.6931472
          %v561 = vadd.f32 %v557, %v560
          %vm562 = vcmp.eq.s32.totalorder %v222, 4294967196
          %v563 = vld [vmem:[#allocation4] sm:$0x1]
          %v564 = vsub.f32 %v561, %v563
          %v565 = vsel %vm562, 0.0, %v564
          %566 = vst.msk [vmem:[%s194] sm:$0x1] %vm550, %v565
        $region36: #{tpu_custom_call.1} parent=27 // pred_fallthru
          _
        %s567 = sand.u32 %s103, 1
        %s568 = scalar_lea.sflag [#allocation6], %s567
        %s569 = sand.u32 %s103, 1
        %s570 = scalar_lea.vmem [#allocation5], %s569
        // Predicated region
        $region37: #{tpu_custom_call.1} parent=27 // pred_check
          %p571 = pneg %p113
        $region38: #{tpu_custom_call.1} parent=27 // pred_check_branch
          %573 = sbr.rel (%p571) target = $region40
        $region39: #{tpu_custom_call.1} parent=27 // pred_region
          %s575 = ssub.s32 16, 16
          %576 = vsyncadd %s568, %s575
          %s577 = sadd.s32 %s22, %s21
          %s578 = smul.addr %s577, 16
          %s579 = scalar_lea.hbm %s2, %s578
          %s581 = sshll.u32 %s570, 4
          %s582 = int_to_ptr.vmem [resolvable:$true] %s581
          %584 = dma.vmem_to_hbm [thread:$0]  %s582, 16, %s579, %s568
        $region40: #{tpu_custom_call.1} parent=27 // pred_fallthru
          _
      $region28: #{tpu_custom_call.1} parent=5 // pred_fallthru
        _
      %p585 = scmp.le.s32.totalorder 2, %s11
      // Predicated region
      $region41: #{tpu_custom_call.1} parent=5 // pred_check
        %p586 = pneg %p585
      $region42: #{tpu_custom_call.1} parent=5 // pred_check_branch
        %588 = sbr.rel (%p586) target = $region44
      $region43: #{tpu_custom_call.1} parent=5 // pred_region
        %s589 = ssub.s32 %s11, 2
        // Predicated region
        $region45: #{tpu_custom_call.1} parent=43 // pred_check
          %p590 = pneg %p119
        $region46: #{tpu_custom_call.1} parent=43 // pred_check_branch
          %592 = sbr.rel (%p590) target = $region48
        $region47: #{tpu_custom_call.1} parent=43 // pred_region
          %s593 = sand.u32 %s104, 1
          %s594 = scalar_lea.sflag [#allocation6], %s593
          %s595 = sand.u32 %s104, 1
          %s596 = scalar_lea.vmem [#allocation5], %s595
          %597 = dma.done %s594, 16
        $region48: #{tpu_custom_call.1} parent=43 // pred_fallthru
          _
      $region44: #{tpu_custom_call.1} parent=5 // pred_fallthru
        _
    $region6: #{tpu_custom_call.1} parent=1 // loop_footer
      %s15 = sadd.s32 1, %s11
    $region7: #{tpu_custom_call.1} parent=1 // loop_footer_branch
      %10 = sbr.rel target = $region3
    $region8: #{tpu_custom_call.1} parent=1 // loop_exit
      _
    %598 = vsyncpa [#allocation6], 1
    %s599 = scalar_lea.sflag [#allocation6], 1
    %600 = vsyncpa %s599, 1

</llo_original>
